<compile_context>
chip_gen: v7x
topology: tpu7x:2x2x1
jax: 0.10.0
libtpu: 0.0.40
codegen_flags: <defaults>
</compile_context>

<pallas_src>
import functools

import jax
import jax.numpy as jnp
from jax import lax
from jax.experimental import pallas as pl
from jax.experimental.pallas import tpu as pltpu

_SLAB = 8      # one sublane tile of fused (b, c) planes
_LANE = 128


def _round_up(x, m):
    return ((x + m - 1) // m) * m


# --------------------------------------------------------------------------
# One-time probe of pltpu.roll's rotation convention so the tap shifts can
# never be silently reversed.
# --------------------------------------------------------------------------
_ROLL_SIGN_CACHE = []


def _roll_sign():
    """+1 if pltpu.roll matches jnp.roll (out[i] = in[(i - shift) % n]), else -1."""
    if _ROLL_SIGN_CACHE:
        return _ROLL_SIGN_CACHE[0]

    def kern(x_ref, o_ref):
        o_ref[...] = pltpu.roll(x_ref[...], shift=1, axis=1)

    probe = jnp.broadcast_to(jnp.arange(_LANE, dtype=jnp.float32), (_SLAB, _LANE))
    rolled = pl.pallas_call(
        kern, out_shape=jax.ShapeDtypeStruct((_SLAB, _LANE), jnp.float32)
    )(probe)
    sign = 1 if bool(rolled[0, 1] == probe[0, 0]) else -1
    _ROLL_SIGN_CACHE.append(sign)
    return sign


# --------------------------------------------------------------------------
# VMEM budgeting (per generation) and BC tiling.
# --------------------------------------------------------------------------
def _vmem_info():
    try:
        cap = int(pltpu.get_tpu_info().vmem_capacity_bytes)
    except Exception:
        cap = 64 * 1024 * 1024                       # assume most restrictive (v7x)
    if cap <= 64 * 1024 * 1024:                      # v7x: 64 MiB per TensorCore
        return cap, 12 * 1024 * 1024, 32 * 1024 * 1024
    return cap, 28 * 1024 * 1024, 64 * 1024 * 1024   # v5e/v6e: 128 MiB physical


def _pick_tiling(bc, hw, k, itemsize):
    cap, budget, vmem_limit = _vmem_info()
    # Per grid step: in + out are double-buffered (4 copies of a fused plane),
    # plus the constant tap-plane block (2 buffers) and ~4 slab-sized
    # temporaries (slab load, rolled tap, accumulator, store staging).
    fixed = 4 * hw * _SLAB * (2 * k * k + 4)
    per_plane = itemsize * hw * 4
    avail = max(budget - fixed, per_plane * _SLAB)
    max_tile = max(_SLAB, (avail // per_plane) // _SLAB * _SLAB)

    bc8 = _round_up(max(bc, _SLAB), _SLAB)
    tile_bc = min(max_tile, bc8)
    if tile_bc == bc8 and bc8 >= 2 * _SLAB:
        # Keep >= 2 grid steps so the 'parallel' axis can shard across both
        # v7x TensorCores and DMA overlaps compute on v5e/v6e.
        tile_bc = max(_SLAB, (bc8 // 2) // _SLAB * _SLAB)
    n_tiles = pl.cdiv(bc8, tile_bc)
    bc_pad = n_tiles * tile_bc

    need = fixed + per_plane * tile_bc + (2 << 20)
    if need > vmem_limit:
        # TODO(synk): add an H-halo spatial grid axis for very large planes
        # instead of leaning on a raised VMEM limit here.
        vmem_limit = min(cap, _round_up(need, 1 << 20))
    return tile_bc, n_tiles, bc_pad, int(vmem_limit)


# --------------------------------------------------------------------------
# Kernel
# --------------------------------------------------------------------------
def _share_sep_conv_kernel(wp_ref, x_ref, o_ref, *, shifts, n_slabs):
    """One grid step = `tile_bc` fused (b, c) planes, flattened H*W on lanes.

    wp_ref : (k*k, 8, H*W) f32  per-tap masked weight planes (constant block)
    x_ref  : (tile_bc, H*W)     input planes
    o_ref  : (tile_bc, H*W)     output planes
    """

    def slab(r0):
        xs = x_ref[pl.ds(r0, _SLAB), :].astype(jnp.float32)     # aligned sublane slab
        acc = None
        for t, sh in enumerate(shifts):                         # k*k taps, unrolled
            xt = xs if sh == 0 else pltpu.roll(xs, shift=sh, axis=1)   # XLU lane rotate
            term = wp_ref[t] * xt                               # boundary mask is in wp
            acc = term if acc is None else acc + term
        o_ref[pl.ds(r0, _SLAB), :] = acc.astype(o_ref.dtype)

    if n_slabs == 1:
        slab(0)
    else:
        def body(s, carry):
            slab(pl.multiple_of(s * _SLAB, _SLAB))
            return carry
        lax.fori_loop(0, n_slabs, body, 0, unroll=n_slabs <= 4)


# --------------------------------------------------------------------------
# Wrapper (ShareSepConv.forward equivalent)
# --------------------------------------------------------------------------
def share_sep_conv(x, weight, kernel_size):
    """x: [B, C, H, W] float32; weight: [1, 1, k, k] shared depthwise kernel."""
    assert kernel_size % 2 == 1, "kernel size should be odd"
    k = kernel_size
    p = (k - 1) // 2
    B, C, H, W = x.shape
    HW = H * W
    BC = B * C

    sign = _roll_sign()

    # Per-tap masked weight planes (weight value where the tap stays inside the
    # image, 0 where the conv's zero padding would apply), pre-broadcast to one
    # 8-row sublane slab so the kernel never broadcasts across sublanes.
    hh = jnp.arange(H, dtype=jnp.int32).reshape(H, 1)
    ww = jnp.arange(W, dtype=jnp.int32).reshape(1, W)
    planes, shifts = [], []
    for di in range(k):
        for dj in range(k):
            oh, ow = di - p, dj - p
            valid = (hh + oh >= 0) & (hh + oh < H) & (ww + ow >= 0) & (ww + ow < W)
            wv = weight[0, 0, di, dj].astype(jnp.float32)
            planes.append(jnp.where(valid, wv, jnp.float32(0)).reshape(HW))
            s = oh * W + ow                         # flat tap offset in the H*W plane
            shifts.append((sign * -s) % HW)         # non-negative lane-roll amount
    w_planes = jnp.broadcast_to(jnp.stack(planes)[:, None, :], (k * k, _SLAB, HW))

    tile_bc, n_tiles, bc_pad, vmem_limit = _pick_tiling(
        BC, HW, k, jnp.dtype(x.dtype).itemsize
    )

    x_flat = x.reshape(BC, HW)                      # free reshape: NCHW is contiguous
    if bc_pad != BC:
        x_flat = jnp.pad(x_flat, ((0, bc_pad - BC), (0, 0)))

    kern = functools.partial(
        _share_sep_conv_kernel, shifts=tuple(shifts), n_slabs=tile_bc // _SLAB
    )

    out_flat = pl.pallas_call(
        kern,
        out_shape=jax.ShapeDtypeStruct((bc_pad, HW), x.dtype),
        grid=(n_tiles,),
        in_specs=[
            pl.BlockSpec((k * k, _SLAB, HW), lambda i: (0, 0, 0)),  # tap planes (const)
            pl.BlockSpec((tile_bc, HW), lambda i: (i, 0)),          # input planes
        ],
        out_specs=pl.BlockSpec((tile_bc, HW), lambda i: (i, 0)),
        compiler_params=pltpu.CompilerParams(
            dimension_semantics=("parallel",),
            vmem_limit_bytes=vmem_limit,
        ),
    )(w_planes, x_flat)

    if bc_pad != BC:
        out_flat = out_flat[:BC]
    return out_flat.reshape(B, C, H, W)


# --------------------------------------------------------------------------
# Pure-JAX reference: F.conv2d(x, weight.expand(C,1,k,k), groups=C)
# --------------------------------------------------------------------------
def _reference_depthwise_conv(x, weight, kernel_size):
    B, C, H, W = x.shape
    p = (kernel_size - 1) // 2
    w = jnp.broadcast_to(weight, (C, 1, kernel_size, kernel_size))
    return lax.conv_general_dilated(
        x, w,
        window_strides=(1, 1),
        padding=((p, p), (p, p)),
        dimension_numbers=("NCHW", "OIHW", "NCHW"),
        feature_group_count=C,
    )


if __name__ == "__main__":
    kernel_size = 3
    B, C, H, W = 2, 4, 16, 16

    key = jax.random.PRNGKey(0)
    kx, kw = jax.random.split(key)
    x = jax.random.normal(kx, (B, C, H, W), dtype=jnp.float32)

    # Weight exactly as the module's __init__ (zeros with a 1 at the center)...
    w_init = jnp.zeros((1, 1, kernel_size, kernel_size), jnp.float32)
    w_init = w_init.at[0, 0, (kernel_size - 1) // 2, (kernel_size - 1) // 2].set(1.0)
    # ...plus a dense random weight so every tap and boundary mask is exercised.
    w_rand = jax.random.normal(kw, (1, 1, kernel_size, kernel_size), jnp.float32)

    for wgt in (w_init, w_rand):
        out = jax.block_until_ready(share_sep_conv(x, wgt, kernel_size))
        ref = _reference_depthwise_conv(x, wgt, kernel_size)
        assert out.shape == (B, C, H, W)
        assert jnp.allclose(out, ref, atol=1e-5, rtol=1e-5)

    print("KERNEL_OK")
</pallas_src>

<mosaic_0001>
module attributes {stable_mosaic.version = 11 : i64} {
  func.func @kern(%arg0: memref<8x128xf32, #tpu.memory_space<vmem>>, %arg1: memref<8x128xf32, #tpu.memory_space<vmem>>) attributes {dimension_semantics = [], scalar_prefetch = 0 : i64, scratch_operands = 0 : i64, tpu.core_type = #tpu.core_type<tc>} {
    %c0 = arith.constant 0 : index
    %c0_0 = arith.constant 0 : index
    %0 = vector.load %arg0[%c0, %c0_0] : memref<8x128xf32, #tpu.memory_space<vmem>>, vector<8x128xf32>
    %c1_i32 = arith.constant 1 : i32
    %1 = tpu.dynamic_rotate %0 by %c1_i32 dim 1 : vector<8x128xf32>, i32 -> vector<8x128xf32>
    %c0_1 = arith.constant 0 : index
    %c0_2 = arith.constant 0 : index
    %2 = vector.load %arg1[%c0_1, %c0_2] : memref<8x128xf32, #tpu.memory_space<vmem>>, vector<8x128xf32>
    tpu.vector_store %arg1[%c0_1, %c0_2], %1 {strides = array<i32>} : memref<8x128xf32, #tpu.memory_space<vmem>>, vector<8x128xf32>,
    return
  }
}

</mosaic_0001>

<llo_original>
// kernel: tpu_custom_call.1
$region0: #{tpu_custom_call.1}
  #allocation0 [shape = 'u32[]', space=smem, size = 0x4, offset = 0x4, fixed_abs, tag = 'smem constant byte address 0x4 - core index']
  #allocation1 [shape = 'u32[144,128]{1,0:T(1,128)}', space=vmem, size = 0x12000, scoped, tag = 'internal scratch']
  %s0 = inlined_call_operand.hbm [shape: f32[8,128], index: 0, kind: input, shape index: {}]
  %s1 = inlined_call_operand.hbm [shape: f32[8,128], index: 1, kind: output, shape index: {}]
  %s2 = sld [smem:[#allocation0]]
  $region18: #{tpu_custom_call.1} parent=0
    _
  %s4 = ssub.s32 1, %s2
  %s5 = scalar_select 0, %s4, %s2
  $region1: #{tpu_custom_call.1} parent=0
    #allocation2 [shape = 'u8[4096]{0}', space=vmem, size = 0x1000, scoped, tag = 'input window, operand 0, single buffered']
    #allocation3 [shape = 's32[1]{0}', space=sflag, size = 0x4, scoped, tag = 'scoped memory for tpu_custom_call.1']
    #allocation4 [shape = 's32[1]{0}', space=sflag, size = 0x4, scoped, tag = 'scoped memory for tpu_custom_call.1']
    #allocation5 [shape = 'u8[4096]{0}', space=vmem, size = 0x1000, scoped, tag = 'output window, operand 0, single buffered']
    %6 = vsyncpa [#allocation3], 0
    %7 = vsyncpa [#allocation4], 0
    // Predicated region
    $region2: #{tpu_custom_call.1} parent=1 // pred_check
      _
    $region3: #{tpu_custom_call.1} parent=1 // pred_check_branch
      %9 = sbr.rel (0) target = $region5
    $region4: #{tpu_custom_call.1} parent=1 // pred_region
      %s11 = ssub.s32 128, 128
      %12 = vsyncadd [#allocation3], %s11
      %s14 = sshll.u32 [#allocation2], 4
      %s15 = int_to_ptr.vmem [resolvable:$true] %s14
      %17 = dma.hbm_to_vmem [thread:$0]  %s0, 128, %s15, [#allocation3]
    $region5: #{tpu_custom_call.1} parent=1 // pred_fallthru
      _
    // Predicated region
    $region6: #{tpu_custom_call.1} parent=1 // pred_check
      _
    $region7: #{tpu_custom_call.1} parent=1 // pred_check_branch
      %19 = sbr.rel (0) target = $region9
    $region8: #{tpu_custom_call.1} parent=1 // pred_region
      %20 = dma.done [#allocation3], 128
    $region9: #{tpu_custom_call.1} parent=1 // pred_fallthru
      _
    %v21 = vld [vmem:[#allocation2] sm:$0xff]
    %22 = vrot.lane.b32.xlu0 %v21, 1
    %v23 = vpop.permute.xlu0 %22
    %24 = vst [vmem:[#allocation5] sm:$0xff] %v23
    // Predicated region
    $region10: #{tpu_custom_call.1} parent=1 // pred_check
      _
    $region11: #{tpu_custom_call.1} parent=1 // pred_check_branch
      %26 = sbr.rel (0) target = $region13
    $region12: #{tpu_custom_call.1} parent=1 // pred_region
      %s28 = ssub.s32 128, 128
      %29 = vsyncadd [#allocation4], %s28
      %s31 = sshll.u32 [#allocation5], 4
      %s32 = int_to_ptr.vmem [resolvable:$true] %s31
      %34 = dma.vmem_to_hbm [thread:$0]  %s32, 128, %s1, [#allocation4]
    $region13: #{tpu_custom_call.1} parent=1 // pred_fallthru
      _
    // Predicated region
    $region14: #{tpu_custom_call.1} parent=1 // pred_check
      _
    $region15: #{tpu_custom_call.1} parent=1 // pred_check_branch
      %36 = sbr.rel (0) target = $region17
    $region16: #{tpu_custom_call.1} parent=1 // pred_region
      %37 = dma.done [#allocation4], 128
    $region17: #{tpu_custom_call.1} parent=1 // pred_fallthru
      _
    %38 = vsyncpa [#allocation3], 1
    %39 = vsyncpa [#allocation4], 1

</llo_original>
